<compile_context>
chip_gen: v6e
topology: v6e:2x2x1
jax: 0.10.0
libtpu: 0.0.40
codegen_flags: <defaults>
</compile_context>

<pallas_src>
import jax
import jax.numpy as jnp
from jax.experimental import pallas as pl
from jax.experimental.pallas import tpu as pltpu

_EPS = 1e-8  # matches torch.nn.CosineSimilarity default eps


def _round_up(x, m):
    return ((x + m - 1) // m) * m


def _pick_block_rows(B, D, in_itemsize, *, min_tiles=4, vmem_budget_bytes=24 << 20):
    """Batch tile (multiple of 8) sized by bytes, capped so the grid has
    >= min_tiles steps when the batch is large enough (v7x megacore)."""
    b_pad = _round_up(int(B), 8)
    # VMEM bytes per batch row: 3 inputs x 2 pipeline buffers (input dtype)
    # + ~3 f32-sized compute temporaries (upcasts / products).
    row_bytes = 6 * D * in_itemsize + 3 * D * 4
    tb_budget = max(8, (vmem_budget_bytes // row_bytes) // 8 * 8)
    # Cap so there are >= min_tiles grid steps (when possible) so the
    # "parallel" axis can be sharded across v7x's two TensorCores.
    tb_split = max(8, _round_up(-(-b_pad // min_tiles), 8))
    return int(min(tb_budget, tb_split, b_pad))


def _make_triplet_kernel(margin, batch, block_rows):
    margin_f = float(margin)
    batch = int(batch)
    tb = int(block_rows)
    has_tail = (batch % tb) != 0  # static: generate masking code only if needed

    def kernel(a_ref, p_ref, n_ref, out_ref):
        # Load (TB, D) tiles; upcast (bf16-friendly) — VPU work hidden under DMA.
        a = a_ref[...].astype(jnp.float32)
        p = p_ref[...].astype(jnp.float32)
        n = n_ref[...].astype(jnp.float32)

        # Per-sample reductions along the feature (lane) axis -> (TB, 1).
        dot_ap = jnp.sum(a * p, axis=1, keepdims=True)
        dot_an = jnp.sum(a * n, axis=1, keepdims=True)
        nsq_a = jnp.sum(a * a, axis=1, keepdims=True)
        nsq_p = jnp.sum(p * p, axis=1, keepdims=True)
        nsq_n = jnp.sum(n * n, axis=1, keepdims=True)

        # cos(x, y) = dot / max(||x||*||y||, eps) == dot * rsqrt(max(nsq_x*nsq_y, eps^2))
        # rsqrt runs on the EUP slot (free alongside VPU / load traffic).
        eps_sq = jnp.float32(_EPS * _EPS)
        sim_pos = dot_ap * jax.lax.rsqrt(jnp.maximum(nsq_a * nsq_p, eps_sq))
        sim_neg = dot_an * jax.lax.rsqrt(jnp.maximum(nsq_a * nsq_n, eps_sq))
        losses = jnp.maximum(jnp.float32(margin_f) - (sim_pos - sim_neg), 0.0)

        def write(partial):
            # Single broadcast store of the scalar partial into the whole
            # lane-dense (1, 8, 128) block; wrapper reads [.., 0, 0].
            out_ref[...] = jnp.full(out_ref.shape, partial, jnp.float32)

        if has_tail:
            i = pl.program_id(0)
            last = pl.num_programs(0) - 1

            @pl.when(i == last)
            def _():
                # Only the last tile contains padded rows; mask them out.
                row = jax.lax.broadcasted_iota(jnp.int32, losses.shape, 0)
                valid = (i * tb + row) < batch
                write(jnp.sum(jnp.where(valid, losses, 0.0)))

            @pl.when(i != last)
            def _():
                write(jnp.sum(losses))
        else:
            write(jnp.sum(losses))

    return kernel


def triplet_loss(anchor, positive, negative, margin=0.2, block_rows=None):
    """Pallas TPU implementation of TripletLoss.forward.

    anchor/positive/negative: (B, D) arrays (f32 or bf16 — bf16 halves HBM
    traffic; the kernel upcasts internally). Returns a scalar float32 loss.
    """
    assert anchor.shape == positive.shape == negative.shape
    assert anchor.ndim == 2
    B, D = anchor.shape
    itemsize = jnp.dtype(anchor.dtype).itemsize

    if block_rows is None:
        block_rows = _pick_block_rows(B, D, itemsize)
    TB = int(block_rows)
    assert TB % 8 == 0, "batch tile must be a multiple of 8 sublanes"

    num_tiles = -(-B // TB)  # ceil(B / TB)

    # Scoped-VMEM limit: 3 inputs x 2 pipeline buffers + f32 compute
    # temporaries + headroom; above v5e's 16 MiB scoped default, comfortably
    # under v7x's 64 MiB-per-TC physical VMEM.
    in_flight_bytes = 6 * TB * D * itemsize
    temp_bytes = 3 * TB * D * 4
    vmem_limit = int(min(max(in_flight_bytes + temp_bytes + (4 << 20), 16 << 20),
                         40 << 20))

    kernel = _make_triplet_kernel(margin, B, TB)

    cost = pl.CostEstimate(
        flops=10 * B * D,                                   # 5 muls + 5 add-ish per elem
        transcendentals=2 * B,                              # two rsqrt per sample
        bytes_accessed=3 * B * D * itemsize + num_tiles * 8 * 128 * 4,
    )

    partials = pl.pallas_call(
        kernel,
        out_shape=jax.ShapeDtypeStruct((num_tiles, 8, 128), jnp.float32),
        grid_spec=pl.GridSpec(
            grid=(num_tiles,),
            in_specs=[
                pl.BlockSpec((TB, D), lambda i: (i, 0)),   # anchor
                pl.BlockSpec((TB, D), lambda i: (i, 0)),   # positive
                pl.BlockSpec((TB, D), lambda i: (i, 0)),   # negative
            ],
            out_specs=pl.BlockSpec((1, 8, 128), lambda i: (i, 0, 0)),
        ),
        compiler_params=pltpu.CompilerParams(
            dimension_semantics=("parallel",),   # tiles independent -> megacore-shardable
            vmem_limit_bytes=vmem_limit,
        ),
        cost_estimate=cost,
    )(anchor, positive, negative)

    # Tiny final reduction in plain JAX (num_tiles scalars).
    return jnp.sum(partials[:, 0, 0]) / jnp.float32(B)


def _reference_triplet_loss(anchor, positive, negative, margin=0.2):
    """Pure-JAX reference for correctness checking."""
    def cos(x, y):
        num = jnp.sum(x * y, axis=1)
        den = jnp.maximum(
            jnp.linalg.norm(x, axis=1) * jnp.linalg.norm(y, axis=1), _EPS)
        return num / den

    sp = cos(anchor, positive)
    sn = cos(anchor, negative)
    return jnp.mean(jnp.maximum(margin - (sp - sn), 0.0))


if __name__ == "__main__":
    key = jax.random.PRNGKey(0)
    k1, k2, k3, k4, k5, k6 = jax.random.split(key, 6)

    # Case 1: B not a multiple of the tile -> tail-masked path.
    B, D = 20, 128
    anchor = jax.random.normal(k1, (B, D), dtype=jnp.float32)
    positive = jax.random.normal(k2, (B, D), dtype=jnp.float32)
    negative = jax.random.normal(k3, (B, D), dtype=jnp.float32)

    ref = _reference_triplet_loss(anchor, positive, negative, margin=0.2)
    loss = jax.block_until_ready(triplet_loss(anchor, positive, negative, margin=0.2))
    assert jnp.allclose(loss, ref, atol=3e-5, rtol=1e-4), (loss, ref)

    # Forced single-tile path (TB=24 > B): padded rows masked inside one tile.
    loss_single = jax.block_until_ready(
        triplet_loss(anchor, positive, negative, margin=0.2, block_rows=24))
    assert jnp.allclose(loss_single, ref, atol=3e-5, rtol=1e-4), (loss_single, ref)

    # Case 2: B divisible by the tile -> no-tail (mask-free) code path.
    B2 = 16
    a2 = jax.random.normal(k4, (B2, D), dtype=jnp.float32)
    p2 = jax.random.normal(k5, (B2, D), dtype=jnp.float32)
    n2 = jax.random.normal(k6, (B2, D), dtype=jnp.float32)
    ref2 = _reference_triplet_loss(a2, p2, n2, margin=0.2)
    loss2 = jax.block_until_ready(triplet_loss(a2, p2, n2, margin=0.2))
    assert jnp.allclose(loss2, ref2, atol=3e-5, rtol=1e-4), (loss2, ref2)

    print("KERNEL_OK")
</pallas_src>

<mosaic_0001>
module attributes {stable_mosaic.version = 11 : i64} {
  func.func @kernel(%arg0: i32, %arg1: memref<8x128xf32, #tpu.memory_space<vmem>>, %arg2: memref<8x128xf32, #tpu.memory_space<vmem>>, %arg3: memref<8x128xf32, #tpu.memory_space<vmem>>, %arg4: memref<1x8x128xf32, #tpu.memory_space<vmem>>) attributes {dimension_semantics = [#tpu.dimension_semantics<parallel>], iteration_bounds = array<i64: 3>, scalar_prefetch = 0 : i64, scratch_operands = 0 : i64, tpu.core_type = #tpu.core_type<tc>, window_params = [{transform_indices = @transform_0, window_bounds = array<i64: 8, 128>}, {transform_indices = @transform_1, window_bounds = array<i64: 8, 128>}, {transform_indices = @transform_2, window_bounds = array<i64: 8, 128>}, {transform_indices = @transform_3, window_bounds = array<i64: 1, 8, 128>}]} {
    %c0 = arith.constant 0 : index
    %c0_0 = arith.constant 0 : index
    %0 = vector.load %arg1[%c0, %c0_0] : memref<8x128xf32, #tpu.memory_space<vmem>>, vector<8x128xf32>
    %c0_1 = arith.constant 0 : index
    %c0_2 = arith.constant 0 : index
    %1 = vector.load %arg2[%c0_1, %c0_2] : memref<8x128xf32, #tpu.memory_space<vmem>>, vector<8x128xf32>
    %c0_3 = arith.constant 0 : index
    %c0_4 = arith.constant 0 : index
    %2 = vector.load %arg3[%c0_3, %c0_4] : memref<8x128xf32, #tpu.memory_space<vmem>>, vector<8x128xf32>
    %3 = arith.mulf %0, %1 : vector<8x128xf32>
    %cst = arith.constant dense<0.000000e+00> : vector<8xf32>
    %4 = vector.multi_reduction <add>, %3, %cst [1] : vector<8x128xf32> to vector<8xf32>
    %5 = vector.shape_cast %4 : vector<8xf32> to vector<8x1xf32>
    %6 = arith.mulf %0, %2 : vector<8x128xf32>
    %cst_5 = arith.constant dense<0.000000e+00> : vector<8xf32>
    %7 = vector.multi_reduction <add>, %6, %cst_5 [1] : vector<8x128xf32> to vector<8xf32>
    %8 = vector.shape_cast %7 : vector<8xf32> to vector<8x1xf32>
    %9 = arith.mulf %0, %0 : vector<8x128xf32>
    %cst_6 = arith.constant dense<0.000000e+00> : vector<8xf32>
    %10 = vector.multi_reduction <add>, %9, %cst_6 [1] : vector<8x128xf32> to vector<8xf32>
    %11 = vector.shape_cast %10 : vector<8xf32> to vector<8x1xf32>
    %12 = arith.mulf %1, %1 : vector<8x128xf32>
    %cst_7 = arith.constant dense<0.000000e+00> : vector<8xf32>
    %13 = vector.multi_reduction <add>, %12, %cst_7 [1] : vector<8x128xf32> to vector<8xf32>
    %14 = vector.shape_cast %13 : vector<8xf32> to vector<8x1xf32>
    %15 = arith.mulf %2, %2 : vector<8x128xf32>
    %cst_8 = arith.constant dense<0.000000e+00> : vector<8xf32>
    %16 = vector.multi_reduction <add>, %15, %cst_8 [1] : vector<8x128xf32> to vector<8xf32>
    %17 = vector.shape_cast %16 : vector<8xf32> to vector<8x1xf32>
    %18 = arith.mulf %11, %14 : vector<8x1xf32>
    %cst_9 = arith.constant 1.000000e-16 : f32
    %19 = vector.broadcast %cst_9 : f32 to vector<8x1xf32>
    %20 = arith.maximumf %18, %19 : vector<8x1xf32>
    %21 = math.rsqrt %20 : vector<8x1xf32>
    %22 = arith.mulf %5, %21 : vector<8x1xf32>
    %23 = arith.mulf %11, %17 : vector<8x1xf32>
    %cst_10 = arith.constant 1.000000e-16 : f32
    %24 = vector.broadcast %cst_10 : f32 to vector<8x1xf32>
    %25 = arith.maximumf %23, %24 : vector<8x1xf32>
    %26 = math.rsqrt %25 : vector<8x1xf32>
    %27 = arith.mulf %8, %26 : vector<8x1xf32>
    %28 = arith.subf %22, %27 : vector<8x1xf32>
    %cst_11 = arith.constant 2.000000e-01 : f32
    %29 = vector.broadcast %cst_11 : f32 to vector<8x1xf32>
    %30 = arith.subf %29, %28 : vector<8x1xf32>
    %cst_12 = arith.constant 0.000000e+00 : f32
    %31 = vector.broadcast %cst_12 : f32 to vector<8x1xf32>
    %32 = arith.maximumf %30, %31 : vector<8x1xf32>
    %c2_i32 = arith.constant 2 : i32
    %33 = arith.cmpi eq, %arg0, %c2_i32 : i32
    %34 = arith.extui %33 : i1 to i32
    %c0_i32 = arith.constant 0 : i32
    %35 = arith.cmpi ne, %34, %c0_i32 : i32
    scf.if %35 {
      %39 = tpu.iota {dimensions = array<i32: 0>} : vector<8x1xi32>
      %c8_i32 = arith.constant 8 : i32
      %40 = arith.muli %arg0, %c8_i32 : i32
      %41 = vector.broadcast %40 : i32 to vector<8x1xi32>
      %42 = arith.addi %41, %39 : vector<8x1xi32>
      %c20_i32 = arith.constant 20 : i32
      %43 = vector.broadcast %c20_i32 : i32 to vector<8x1xi32>
      %44 = arith.cmpi slt, %42, %43 : vector<8x1xi32>
      %cst_15 = arith.constant 0.000000e+00 : f32
      %45 = vector.broadcast %cst_15 : f32 to vector<8x1xf32>
      %46 = arith.select %44, %32, %45 : vector<8x1xi1>, vector<8x1xf32>
      %47 = vector.shape_cast %46 : vector<8x1xf32> to vector<1x8x1xf32>
      %cst_16 = arith.constant dense<0.000000e+00> : vector<1xf32>
      %48 = vector.multi_reduction <add>, %47, %cst_16 [1, 2] : vector<1x8x1xf32> to vector<1xf32>
      %49 = vector.shape_cast %48 : vector<1xf32> to vector<1x1x1xf32>
      %50 = vector.extract %49[0, 0, 0] : f32 from vector<1x1x1xf32>
      %51 = vector.broadcast %50 : f32 to vector<1x8x128xf32>
      %c0_17 = arith.constant 0 : index
      %c0_18 = arith.constant 0 : index
      %c0_19 = arith.constant 0 : index
      %52 = vector.load %arg4[%c0_17, %c0_18, %c0_19] : memref<1x8x128xf32, #tpu.memory_space<vmem>>, vector<1x8x128xf32>
      tpu.vector_store %arg4[%c0_17, %c0_18, %c0_19], %51 {strides = array<i32>} : memref<1x8x128xf32, #tpu.memory_space<vmem>>, vector<1x8x128xf32>,
    } else {
    }
    %c2_i32_13 = arith.constant 2 : i32
    %36 = arith.cmpi ne, %arg0, %c2_i32_13 : i32
    %37 = arith.extui %36 : i1 to i32
    %c0_i32_14 = arith.constant 0 : i32
    %38 = arith.cmpi ne, %37, %c0_i32_14 : i32
    scf.if %38 {
      %39 = vector.shape_cast %32 : vector<8x1xf32> to vector<1x8x1xf32>
      %cst_15 = arith.constant dense<0.000000e+00> : vector<1xf32>
      %40 = vector.multi_reduction <add>, %39, %cst_15 [1, 2] : vector<1x8x1xf32> to vector<1xf32>
      %41 = vector.shape_cast %40 : vector<1xf32> to vector<1x1x1xf32>
      %42 = vector.extract %41[0, 0, 0] : f32 from vector<1x1x1xf32>
      %43 = vector.broadcast %42 : f32 to vector<1x8x128xf32>
      %c0_16 = arith.constant 0 : index
      %c0_17 = arith.constant 0 : index
      %c0_18 = arith.constant 0 : index
      %44 = vector.load %arg4[%c0_16, %c0_17, %c0_18] : memref<1x8x128xf32, #tpu.memory_space<vmem>>, vector<1x8x128xf32>
      tpu.vector_store %arg4[%c0_16, %c0_17, %c0_18], %43 {strides = array<i32>} : memref<1x8x128xf32, #tpu.memory_space<vmem>>, vector<1x8x128xf32>,
    } else {
    }
    return
  }
  func.func @transform_0(%arg0: i32) -> (i32, i32) {
    %c0_i32 = arith.constant 0 : i32
    %c0_i32_0 = arith.constant 0 : i32
    return %arg0, %c0_i32 : i32, i32
  }
  func.func @transform_1(%arg0: i32) -> (i32, i32) {
    %c0_i32 = arith.constant 0 : i32
    %c0_i32_0 = arith.constant 0 : i32
    return %arg0, %c0_i32 : i32, i32
  }
  func.func @transform_2(%arg0: i32) -> (i32, i32) {
    %c0_i32 = arith.constant 0 : i32
    %c0_i32_0 = arith.constant 0 : i32
    return %arg0, %c0_i32 : i32, i32
  }
  func.func @transform_3(%arg0: i32) -> (i32, i32, i32) {
    %c0_i32 = arith.constant 0 : i32
    %c0_i32_0 = arith.constant 0 : i32
    %c0_i32_1 = arith.constant 0 : i32
    return %arg0, %c0_i32, %c0_i32_0 : i32, i32, i32
  }
}

</mosaic_0001>

<llo_original>
// kernel: tpu_custom_call.1
$region0: #{tpu_custom_call.1}
  #allocation0 [shape = 'u32[]', space=smem, size = 0x4, offset = 0x4, fixed_abs, tag = 'smem constant byte address 0x4 - core index']
  #allocation1 [shape = 'u32[144,128]{1,0:T(1,128)}', space=vmem, size = 0x12000, scoped, tag = 'internal scratch']
  %s0 = inlined_call_operand.hbm [shape: f32[20,128], index: 0, kind: input, shape index: {}]
  %s1 = inlined_call_operand.hbm [shape: f32[20,128], index: 1, kind: input, shape index: {}]
  %s2 = inlined_call_operand.hbm [shape: f32[20,128], index: 2, kind: input, shape index: {}]
  %s3 = inlined_call_operand.hbm [shape: f32[3,8,128], index: 3, kind: output, shape index: {}]
  %s4 = sld [smem:[#allocation0]]
  $region65: #{tpu_custom_call.1} parent=0
    _
  %s6 = ssub.s32 1, %s4
  %s7 = scalar_select 0, %s6, %s4
  $region1: #{tpu_custom_call.1} parent=0
    #allocation2 [shape = 'u8[8192]{0}', space=vmem, size = 0x2000, scoped, tag = 'input window, operand 0']
    #allocation3 [shape = 's32[2]{0}', space=sflag, size = 0x8, scoped, tag = 'scoped memory for tpu_custom_call.1']
    #allocation4 [shape = 's32[2]{0}', space=sflag, size = 0x8, scoped, tag = 'scoped memory for tpu_custom_call.1']
    #allocation5 [shape = 'u8[8192]{0}', space=vmem, size = 0x2000, scoped, tag = 'input window, operand 1']
    #allocation6 [shape = 's32[2]{0}', space=sflag, size = 0x8, scoped, tag = 'scoped memory for tpu_custom_call.1']
    #allocation7 [shape = 'u8[8192]{0}', space=vmem, size = 0x2000, scoped, tag = 'input window, operand 2']
    #allocation8 [shape = 'u8[8192]{0}', space=vmem, size = 0x2000, scoped, tag = 'output window, operand 0']
    %8 = vsyncpa [#allocation3], 0
    %s9 = scalar_lea.sflag [#allocation3], 1
    %10 = vsyncpa %s9, 0
    %11 = vsyncpa [#allocation6], 0
    %s12 = scalar_lea.sflag [#allocation6], 1
    %13 = vsyncpa %s12, 0
    %14 = vsyncpa [#allocation4], 0
    %s15 = scalar_lea.sflag [#allocation4], 1
    %16 = vsyncpa %s15, 0
    loop: start=0, step=1, limit=5
    $region2: #{tpu_custom_call.1} parent=1 // loop_pre_header
      _
    $region3: #{tpu_custom_call.1} parent=1 // loop_header
      %s18 = sphi 0, %s22
      %p19 = scmp.ge.s32.totalorder %s18, 5
      %s28 = sphi 0, %s30
      %s31 = sphi 0, %s28
      %s32 = sphi 0, %s31
      %s48 = sphi 0, %s32
      %s54 = sphi 0, %s56
      %s57 = sphi 0, %s54
      %s58 = sphi 0, %s57
      %s74 = sphi 0, %s58
      %s80 = sphi 0, %s82
      %s83 = sphi 0, %s80
      %s84 = sphi 0, %s83
      %s100 = sphi 0, %s84
      %s106 = sphi 0, %s108
      %s109 = sphi 0, %s106
      %s110 = sphi 0, %s109
      %s126 = sphi 0, %s110
    $region4: #{tpu_custom_call.1} parent=1 // loop_header_branch
      %21 = sbr.rel (%p19) target = $region8
    $region5: #{tpu_custom_call.1} parent=1 // loop_body
      %s23 = ssub.s32 %s18, 1
      %s24 = ssub.s32 %s18, 2
      %s25 = sadd.s32 %s18, 1
      %s26 = ssub.s32 %s18, %s25
      %p27 = scmp.eq.s32.totalorder %s26, 0
      %s29 = sadd.s32 %s28, 1
      %s30 = scalar_select %p27, %s28, %s29
      %p33 = pneg %p27
      %p34 = scmp.eq.s32.totalorder %s18, 2
      %p35 = por %p33, %p34
      %p36 = scmp.ne.s32.totalorder %s28, %s31
      %p37 = scmp.eq.s32.totalorder %s18, 0
      %p38 = por %p36, %p37
      %p39 = scmp.ne.s32.totalorder %s28, %s31
      %p40 = scmp.eq.s32.totalorder %s23, 2
      %p41 = por %p39, %p40
      %p42 = scmp.ne.s32.totalorder %s31, %s32
      %p43 = scmp.eq.s32.totalorder %s23, 0
      %p44 = por %p42, %p43
      %p45 = scmp.ne.s32.totalorder %s31, %s32
      %p46 = scmp.eq.s32.totalorder %s24, 2
      %p47 = por %p45, %p46
      %p49 = scmp.ne.s32.totalorder %s32, %s48
      %p50 = scmp.eq.s32.totalorder %s24, 0
      %p51 = por %p49, %p50
      %s52 = ssub.s32 %s18, %s25
      %p53 = scmp.eq.s32.totalorder %s52, 0
      %s55 = sadd.s32 %s54, 1
      %s56 = scalar_select %p53, %s54, %s55
      %p59 = pneg %p53
      %p60 = scmp.eq.s32.totalorder %s18, 2
      %p61 = por %p59, %p60
      %p62 = scmp.ne.s32.totalorder %s54, %s57
      %p63 = scmp.eq.s32.totalorder %s18, 0
      %p64 = por %p62, %p63
      %p65 = scmp.ne.s32.totalorder %s54, %s57
      %p66 = scmp.eq.s32.totalorder %s23, 2
      %p67 = por %p65, %p66
      %p68 = scmp.ne.s32.totalorder %s57, %s58
      %p69 = scmp.eq.s32.totalorder %s23, 0
      %p70 = por %p68, %p69
      %p71 = scmp.ne.s32.totalorder %s57, %s58
      %p72 = scmp.eq.s32.totalorder %s24, 2
      %p73 = por %p71, %p72
      %p75 = scmp.ne.s32.totalorder %s58, %s74
      %p76 = scmp.eq.s32.totalorder %s24, 0
      %p77 = por %p75, %p76
      %s78 = ssub.s32 %s18, %s25
      %p79 = scmp.eq.s32.totalorder %s78, 0
      %s81 = sadd.s32 %s80, 1
      %s82 = scalar_select %p79, %s80, %s81
      %p85 = pneg %p79
      %p86 = scmp.eq.s32.totalorder %s18, 2
      %p87 = por %p85, %p86
      %p88 = scmp.ne.s32.totalorder %s80, %s83
      %p89 = scmp.eq.s32.totalorder %s18, 0
      %p90 = por %p88, %p89
      %p91 = scmp.ne.s32.totalorder %s80, %s83
      %p92 = scmp.eq.s32.totalorder %s23, 2
      %p93 = por %p91, %p92
      %p94 = scmp.ne.s32.totalorder %s83, %s84
      %p95 = scmp.eq.s32.totalorder %s23, 0
      %p96 = por %p94, %p95
      %p97 = scmp.ne.s32.totalorder %s83, %s84
      %p98 = scmp.eq.s32.totalorder %s24, 2
      %p99 = por %p97, %p98
      %p101 = scmp.ne.s32.totalorder %s84, %s100
      %p102 = scmp.eq.s32.totalorder %s24, 0
      %p103 = por %p101, %p102
      %s104 = ssub.s32 %s18, %s25
      %p105 = scmp.eq.s32.totalorder %s104, 0
      %s107 = sadd.s32 %s106, 1
      %s108 = scalar_select %p105, %s106, %s107
      %p111 = pneg %p105
      %p112 = scmp.eq.s32.totalorder %s18, 2
      %p113 = por %p111, %p112
      %p114 = scmp.ne.s32.totalorder %s106, %s109
      %p115 = scmp.eq.s32.totalorder %s18, 0
      %p116 = por %p114, %p115
      %p117 = scmp.ne.s32.totalorder %s106, %s109
      %p118 = scmp.eq.s32.totalorder %s23, 2
      %p119 = por %p117, %p118
      %p120 = scmp.ne.s32.totalorder %s109, %s110
      %p121 = scmp.eq.s32.totalorder %s23, 0
      %p122 = por %p120, %p121
      %p123 = scmp.ne.s32.totalorder %s109, %s110
      %p124 = scmp.eq.s32.totalorder %s24, 2
      %p125 = por %p123, %p124
      %p127 = scmp.ne.s32.totalorder %s110, %s126
      %p128 = scmp.eq.s32.totalorder %s24, 0
      %p129 = por %p127, %p128
      %p130 = scmp.le.s32.totalorder 1, %s18
      %p131 = scmp.lt.s32.totalorder %s18, 4
      %p132 = pnand %p130, %p131
      %p133 = pneg %p132
      // Predicated region
      $region9: #{tpu_custom_call.1} parent=5 // pred_check
        _
      $region10: #{tpu_custom_call.1} parent=5 // pred_check_branch
        %135 = sbr.rel (%p132) target = $region12
      $region11: #{tpu_custom_call.1} parent=5 // pred_region
        %s136 = ssub.s32 %s18, 1
      $region12: #{tpu_custom_call.1} parent=5 // pred_fallthru
        _
      %p137 = scmp.lt.s32.totalorder %s18, 3
      // Predicated region
      $region13: #{tpu_custom_call.1} parent=5 // pred_check
        %p138 = pneg %p137
      $region14: #{tpu_custom_call.1} parent=5 // pred_check_branch
        %140 = sbr.rel (%p138) target = $region16
      $region15: #{tpu_custom_call.1} parent=5 // pred_region
        // Predicated region
        $region17: #{tpu_custom_call.1} parent=15 // pred_check
          %p141 = pneg %p38
        $region18: #{tpu_custom_call.1} parent=15 // pred_check_branch
          %143 = sbr.rel (%p141) target = $region20
        $region19: #{tpu_custom_call.1} parent=15 // pred_region
          %s144 = sand.u32 %s28, 1
          %s145 = scalar_lea.sflag [#allocation3], %s144
          %s146 = sand.u32 %s28, 1
          %s147 = smul.addr %s146, 8
          %s148 = scalar_lea.vmem [#allocation2], %s147
          %s150 = ssub.s32 128, 128
          %151 = vsyncadd %s145, %s150
          %s152 = smul.addr %s18, 128
          %s153 = scalar_lea.hbm %s0, %s152
          %s155 = sshll.u32 %s148, 4
          %s156 = int_to_ptr.vmem [resolvable:$true] %s155
          %158 = dma.hbm_to_vmem [thread:$0]  %s153, 128, %s156, %s145
        $region20: #{tpu_custom_call.1} parent=15 // pred_fallthru
          _
        // Predicated region
        $region21: #{tpu_custom_call.1} parent=15 // pred_check
          %p159 = pneg %p64
        $region22: #{tpu_custom_call.1} parent=15 // pred_check_branch
          %161 = sbr.rel (%p159) target = $region24
        $region23: #{tpu_custom_call.1} parent=15 // pred_region
          %s162 = sand.u32 %s18, 1
          %s163 = scalar_lea.sflag [#allocation6], %s162
          %s164 = sand.u32 %s54, 1
          %s165 = smul.addr %s164, 8
          %s166 = scalar_lea.vmem [#allocation5], %s165
          %s168 = ssub.s32 128, 128
          %169 = vsyncadd %s163, %s168
          %s170 = smul.addr %s18, 128
          %s171 = scalar_lea.hbm %s1, %s170
          %s173 = sshll.u32 %s166, 4
          %s174 = int_to_ptr.vmem [resolvable:$true] %s173
          %176 = dma.hbm_to_vmem [thread:$0]  %s171, 128, %s174, %s163
        $region24: #{tpu_custom_call.1} parent=15 // pred_fallthru
          _
        // Predicated region
        $region25: #{tpu_custom_call.1} parent=15 // pred_check
          %p177 = pneg %p90
        $region26: #{tpu_custom_call.1} parent=15 // pred_check_branch
          %179 = sbr.rel (%p177) target = $region28
        $region27: #{tpu_custom_call.1} parent=15 // pred_region
          %s180 = sand.u32 %s18, 1
          %s181 = scalar_lea.sflag [#allocation6], %s180
          %s182 = sand.u32 %s80, 1
          %s183 = smul.addr %s182, 8
          %s184 = scalar_lea.vmem [#allocation7], %s183
          %s186 = ssub.s32 128, 128
          %187 = vsyncadd %s181, %s186
          %s188 = smul.addr %s18, 128
          %s189 = scalar_lea.hbm %s2, %s188
          %s191 = sshll.u32 %s184, 4
          %s192 = int_to_ptr.vmem [resolvable:$true] %s191
          %194 = dma.hbm_to_vmem [thread:$0]  %s189, 128, %s192, %s181
        $region28: #{tpu_custom_call.1} parent=15 // pred_fallthru
          _
      $region16: #{tpu_custom_call.1} parent=5 // pred_fallthru
        _
      %p195 = scmp.le.s32.totalorder 1, %s18
      %p196 = scmp.lt.s32.totalorder %s18, 4
      %p197 = pnand %p195, %p196
      %p198 = pneg %p197
      // Predicated region
      $region29: #{tpu_custom_call.1} parent=5 // pred_check
        _
      $region30: #{tpu_custom_call.1} parent=5 // pred_check_branch
        %200 = sbr.rel (%p197) target = $region32
      $region31: #{tpu_custom_call.1} parent=5 // pred_region
        %s201 = ssub.s32 %s18, 1
        %s202 = sand.u32 %s31, 1
        %s203 = scalar_lea.sflag [#allocation3], %s202
        %s204 = sand.u32 %s31, 1
        %s205 = smul.addr %s204, 8
        %s206 = scalar_lea.vmem [#allocation2], %s205
        // Predicated region
        $region33: #{tpu_custom_call.1} parent=31 // pred_check
          %p207 = pneg %p44
        $region34: #{tpu_custom_call.1} parent=31 // pred_check_branch
          %209 = sbr.rel (%p207) target = $region36
        $region35: #{tpu_custom_call.1} parent=31 // pred_region
          %210 = dma.done %s203, 128
        $region36: #{tpu_custom_call.1} parent=31 // pred_fallthru
          _
        %s211 = sand.u32 %s23, 1
        %s212 = scalar_lea.sflag [#allocation6], %s211
        %s213 = sand.u32 %s57, 1
        %s214 = smul.addr %s213, 8
        %s215 = scalar_lea.vmem [#allocation5], %s214
        // Predicated region
        $region37: #{tpu_custom_call.1} parent=31 // pred_check
          %p216 = pneg %p70
        $region38: #{tpu_custom_call.1} parent=31 // pred_check_branch
          %218 = sbr.rel (%p216) target = $region40
        $region39: #{tpu_custom_call.1} parent=31 // pred_region
          %219 = dma.done %s212, 128
        $region40: #{tpu_custom_call.1} parent=31 // pred_fallthru
          _
        %s220 = sand.u32 %s23, 1
        %s221 = scalar_lea.sflag [#allocation6], %s220
        %s222 = sand.u32 %s83, 1
        %s223 = smul.addr %s222, 8
        %s224 = scalar_lea.vmem [#allocation7], %s223
        // Predicated region
        $region41: #{tpu_custom_call.1} parent=31 // pred_check
          %p225 = pneg %p96
        $region42: #{tpu_custom_call.1} parent=31 // pred_check_branch
          %227 = sbr.rel (%p225) target = $region44
        $region43: #{tpu_custom_call.1} parent=31 // pred_region
          %228 = dma.done %s221, 128
        $region44: #{tpu_custom_call.1} parent=31 // pred_fallthru
          _
        %s229 = sand.u32 %s31, 1
        %s230 = scalar_lea.sflag [#allocation3], %s229
        %s231 = sand.u32 %s31, 1
        %s232 = smul.addr %s231, 8
        %s233 = scalar_lea.vmem [#allocation2], %s232
        %p234 = pneg %p44
        %p235 = pneg %p41
        %s236 = sand.u32 %s23, 1
        %s237 = scalar_lea.sflag [#allocation6], %s236
        %s238 = sand.u32 %s57, 1
        %s239 = smul.addr %s238, 8
        %s240 = scalar_lea.vmem [#allocation5], %s239
        %p241 = pneg %p70
        %p242 = pneg %p67
        %s243 = sand.u32 %s23, 1
        %s244 = scalar_lea.sflag [#allocation6], %s243
        %s245 = sand.u32 %s83, 1
        %s246 = smul.addr %s245, 8
        %s247 = scalar_lea.vmem [#allocation7], %s246
        %p248 = pneg %p96
        %p249 = pneg %p93
        %p250 = pneg %p122
        %p251 = pneg %p119
        %s252 = sand.u32 %s109, 1
        %s253 = scalar_lea.sflag [#allocation4], %s252
        %s254 = sand.u32 %s109, 1
        %s255 = smul.addr %s254, 8
        %s256 = scalar_lea.vmem [#allocation8], %s255
        %v257 = vld [vmem:[%s206] sm:$0xff]
        %v258 = vld [vmem:[%s215] sm:$0xff]
        %v259 = vld [vmem:[%s224] sm:$0xff]
        %v260 = vmul.f32 %v257, %v258
        %261 = vadd.xlane.f32.xlu0 %v260
        %v262 = vpop.xlane.xlu0 %261
        %v263 = vmul.f32 %v257, %v259
        %264 = vadd.xlane.f32.xlu0 %v263
        %v265 = vpop.xlane.xlu0 %264
        %v266 = vmul.f32 %v257, %v257
        %267 = vadd.xlane.f32.xlu0 %v266
        %v268 = vpop.xlane.xlu0 %267
        %v269 = vmul.f32 %v258, %v258
        %270 = vadd.xlane.f32.xlu0 %v269
        %v271 = vpop.xlane.xlu0 %270
        %v272 = vmul.f32 %v259, %v259
        %273 = vadd.xlane.f32.xlu0 %v272
        %v274 = vpop.xlane.xlu0 %273
        %v275 = vmul.f32 %v268, %v271
        %v276 = vmax.f32 %v275, 1e-16
        %v277 = vrsqrt.pop %v276
        %v278 = vmul.f32 %v262, %v277
        %v279 = vmul.f32 %v268, %v274
        %v280 = vmax.f32 %v279, 1e-16
        %v281 = vrsqrt.pop %v280
        %v282 = vmul.f32 %v265, %v281
        %v283 = vsub.f32 %v278, %v282
        %v284 = vsub.f32 0.2, %v283
        %v285 = vmax.f32 %v284, 0.0
        %p286 = scmp.eq.s32.totalorder %s23, 2
        // Predicated region
        $region45: #{tpu_custom_call.1} parent=31 // pred_check
          %p287 = pneg %p286
        $region46: #{tpu_custom_call.1} parent=31 // pred_check_branch
          %289 = sbr.rel (%p287) target = $region48
        $region47: #{tpu_custom_call.1} parent=31 // pred_region
          %v290 = vlaneseq
          %v291 = vshrl.u32 %v290, 7
          %s292 = smul.u32 %s23, 8
          %v293 = vstv %s292
          %v294 = vadd.s32 %v293, %v291
          %vm295 = vcmp.lt.s32.totalorder %v294, 20
          %v296 = vsel %vm295, %v285, 0.0
          %vm297 = vcmask 7168
          %v298 = vsel %vm297, %v296, 0.0
          %299 = vadd.xlane.f32.xlu0 %v298
          %v300 = vpop.xlane.xlu0 %299
          %v301 = vrot.slane %v300, 4
          %v302 = vadd.f32 %v300, %v301
          %v303 = vrot.slane %v302, 2
          %v304 = vadd.f32 %v302, %v303
          %v305 = vrot.slane %v304, 1
          %v306 = vadd.f32 %v304, %v305
          %s307 = vtos %v306
          %v308 = vstv %s307
          %309 = vst [vmem:[%s256] sm:$0xff] %v308
        $region48: #{tpu_custom_call.1} parent=31 // pred_fallthru
          _
        %p310 = scmp.ne.s32.totalorder %s23, 2
        // Predicated region
        $region49: #{tpu_custom_call.1} parent=31 // pred_check
          %p311 = pneg %p310
        $region50: #{tpu_custom_call.1} parent=31 // pred_check_branch
          %313 = sbr.rel (%p311) target = $region52
        $region51: #{tpu_custom_call.1} parent=31 // pred_region
          %vm314 = vcmask 7168
          %v315 = vsel %vm314, %v285, 0.0
          %316 = vadd.xlane.f32.xlu0 %v315
          %v317 = vpop.xlane.xlu0 %316
          %v318 = vrot.slane %v317, 4
          %v319 = vadd.f32 %v317, %v318
          %v320 = vrot.slane %v319, 2
          %v321 = vadd.f32 %v319, %v320
          %v322 = vrot.slane %v321, 1
          %v323 = vadd.f32 %v321, %v322
          %s324 = vtos %v323
          %v325 = vstv %s324
          %326 = vst [vmem:[%s256] sm:$0xff] %v325
        $region52: #{tpu_custom_call.1} parent=31 // pred_fallthru
          _
        %s327 = sand.u32 %s109, 1
        %s328 = scalar_lea.sflag [#allocation4], %s327
        %s329 = sand.u32 %s109, 1
        %s330 = smul.addr %s329, 8
        %s331 = scalar_lea.vmem [#allocation8], %s330
        // Predicated region
        $region53: #{tpu_custom_call.1} parent=31 // pred_check
          %p332 = pneg %p119
        $region54: #{tpu_custom_call.1} parent=31 // pred_check_branch
          %334 = sbr.rel (%p332) target = $region56
        $region55: #{tpu_custom_call.1} parent=31 // pred_region
          %s336 = ssub.s32 128, 128
          %337 = vsyncadd %s328, %s336
          %s338 = smul.addr %s23, 128
          %s339 = scalar_lea.hbm %s3, %s338
          %s341 = sshll.u32 %s331, 4
          %s342 = int_to_ptr.vmem [resolvable:$true] %s341
          %344 = dma.vmem_to_hbm [thread:$0]  %s342, 128, %s339, %s328
        $region56: #{tpu_custom_call.1} parent=31 // pred_fallthru
          _
      $region32: #{tpu_custom_call.1} parent=5 // pred_fallthru
        _
      %p345 = scmp.le.s32.totalorder 2, %s18
      // Predicated region
      $region57: #{tpu_custom_call.1} parent=5 // pred_check
        %p346 = pneg %p345
      $region58: #{tpu_custom_call.1} parent=5 // pred_check_branch
        %348 = sbr.rel (%p346) target = $region60
      $region59: #{tpu_custom_call.1} parent=5 // pred_region
        %s349 = ssub.s32 %s18, 2
        // Predicated region
        $region61: #{tpu_custom_call.1} parent=59 // pred_check
          %p350 = pneg %p125
        $region62: #{tpu_custom_call.1} parent=59 // pred_check_branch
          %352 = sbr.rel (%p350) target = $region64
        $region63: #{tpu_custom_call.1} parent=59 // pred_region
          %s353 = sand.u32 %s110, 1
          %s354 = scalar_lea.sflag [#allocation4], %s353
          %s355 = sand.u32 %s110, 1
          %s356 = smul.addr %s355, 8
          %s357 = scalar_lea.vmem [#allocation8], %s356
          %358 = dma.done %s354, 128
        $region64: #{tpu_custom_call.1} parent=59 // pred_fallthru
          _
      $region60: #{tpu_custom_call.1} parent=5 // pred_fallthru
        _
    $region6: #{tpu_custom_call.1} parent=1 // loop_footer
      %s22 = sadd.s32 1, %s18
    $region7: #{tpu_custom_call.1} parent=1 // loop_footer_branch
      %17 = sbr.rel target = $region3
    $region8: #{tpu_custom_call.1} parent=1 // loop_exit
      _
    %359 = vsyncpa [#allocation3], 1
    %s360 = scalar_lea.sflag [#allocation3], 1
    %361 = vsyncpa %s360, 1
    %362 = vsyncpa [#allocation6], 1
    %s363 = scalar_lea.sflag [#allocation6], 1
    %364 = vsyncpa %s363, 1
    %365 = vsyncpa [#allocation4], 1
    %s366 = scalar_lea.sflag [#allocation4], 1
    %367 = vsyncpa %s366, 1

</llo_original>
